<compile_context>
chip_gen: v7x
topology: tpu7x:2x2x1
jax: 0.10.0
libtpu: 0.0.40
codegen_flags: <defaults>
</compile_context>

<pallas_src>
import jax
import jax.numpy as jnp
from jax.experimental import pallas as pl
from jax.experimental.pallas import tpu as pltpu

IMAGE_RGB_MEAN = [0.485, 0.456, 0.406]
IMAGE_RGB_STD = [0.229, 0.224, 0.225]

_TARGET_BLOCK_BYTES = 2 * 1024 * 1024  # main-stream bytes per block
_LANE = 128
_SUBLANE = 8


def rgb_norm_kernel(x_ref, sb_ref, o_ref):
    # x_ref : (TR, TL) lane-dense tile of the flattened (N*C, H*W) tensor.
    # sb_ref: (TR, 2) packed per-row [scale, bias] (scale = 1/std, bias = -mean/std).
    x = x_ref[...].astype(jnp.float32)
    sb = sb_ref[...].astype(jnp.float32)
    scale = sb[:, 0:1]
    bias = sb[:, 1:2]
    o_ref[...] = (x * scale + bias).astype(o_ref.dtype)


def _tile_size(dim, align, cap):
    """Tile length along one axis, never exceeding max(align, cap).

    - dim <= align: use the full dim (a block equal to the array dim is legal).
    - else: largest multiple of `align` <= cap that divides `dim` exactly
      (no ragged edge), falling back to the aligned cap (caller uses a cdiv
      grid; Pallas masks the partial edge block).  Block bytes therefore stay
      bounded by the caller's budget for any input shape.
    """
    if dim <= align:
        return dim
    cap = max(align, min(cap, dim))
    cap = (cap // align) * align
    t = cap
    while t >= align:
        if dim % t == 0:
            return t
        t -= align
    return cap


def rgb_forward(x, mean, std, *, donate_input=False):
    """(x - mean) / std with per-channel mean/std, NCHW layout.

    x:    (N, C, H, W)
    mean: (1, C, 1, 1)
    std:  (1, C, 1, 1)
    """
    N, C, H, W = x.shape
    R, L = N * C, H * W
    itemsize = jnp.dtype(x.dtype).itemsize
    # PyTorch promotes integer images to float when subtracting a float buffer.
    if jnp.issubdtype(x.dtype, jnp.floating):
        out_dtype = jnp.dtype(x.dtype)
    else:
        out_dtype = jnp.dtype(jnp.float32)

    # Fold normalization into a single fused multiply-add: y = x*scale + bias.
    std_f = std.astype(jnp.float32).reshape(C)
    mean_f = mean.astype(jnp.float32).reshape(C)
    scale_c = 1.0 / std_f
    bias_c = -mean_f / std_f
    # Row r of the flattened (N*C, H*W) tensor belongs to channel r % C.
    sb = jnp.stack([jnp.tile(scale_c, N), jnp.tile(bias_c, N)], axis=1)  # (R, 2)

    x2 = x.reshape(R, L)  # contiguous reshape: free view in XLA

    # Dtype-aware, lane-dense tiling.
    sublane_align = max(_SUBLANE, 32 // itemsize)  # 8 f32 / 16 bf16 / 32 int8
    TL = _tile_size(L, _LANE, 2048)
    max_rows = max(sublane_align, (_TARGET_BLOCK_BYTES // itemsize) // max(TL, 1))
    TR = _tile_size(R, sublane_align, max_rows)
    gr, gl = pl.cdiv(R, TR), pl.cdiv(L, TL)

    # Lead with the axis that has the most blocks; both axes PARALLEL so a
    # multi-TC chip (v7x) can shard the work no matter which axis is "big".
    if gl > gr:
        grid = (gl, gr)
        x_map = lambda j, i: (i, j)
        sb_map = lambda j, i: (i, 0)
    else:
        grid = (gr, gl)
        x_map = lambda i, j: (i, j)
        sb_map = lambda i, j: (i, 0)

    cost = pl.CostEstimate(
        flops=2 * R * L,
        transcendentals=0,
        bytes_accessed=R * L * (itemsize + out_dtype.itemsize) + sb.size * 4,
    )

    aliases = {}
    if donate_input and out_dtype == jnp.dtype(x.dtype):
        aliases = {0: 0}  # reuse x's HBM buffer for the output

    out2 = pl.pallas_call(
        rgb_norm_kernel,
        out_shape=jax.ShapeDtypeStruct((R, L), out_dtype),
        grid=grid,
        in_specs=[
            pl.BlockSpec((TR, TL), x_map),
            pl.BlockSpec((TR, 2), sb_map),
        ],
        out_specs=pl.BlockSpec((TR, TL), x_map),
        compiler_params=pltpu.CompilerParams(
            dimension_semantics=(pltpu.PARALLEL, pltpu.PARALLEL),
        ),
        cost_estimate=cost,
        input_output_aliases=aliases,
    )(x2, sb)
    return out2.reshape(N, C, H, W)


if __name__ == "__main__":
    key = jax.random.PRNGKey(0)
    N, C, H, W = 2, 3, 16, 16  # RGB module is defined for 3 channels
    x = jax.random.uniform(key, (N, C, H, W), dtype=jnp.float32)

    # Deterministic "buffers" from the module's __init__.
    mean = jnp.asarray(IMAGE_RGB_MEAN, dtype=jnp.float32).reshape(1, C, 1, 1)
    std = jnp.asarray(IMAGE_RGB_STD, dtype=jnp.float32).reshape(1, C, 1, 1)

    out = rgb_forward(x, mean, std)
    out = jax.block_until_ready(out)

    # Reference (mirrors the PyTorch forward). The scale/bias FMA differs from
    # an exact divide by a few ulps, hence the slightly loosened tolerance.
    ref = (x - mean) / std
    assert out.shape == x.shape and out.dtype == x.dtype
    assert jnp.allclose(out, ref, atol=1e-5, rtol=1e-5)

    print("KERNEL_OK")
</pallas_src>

<mosaic_0001>
module attributes {stable_mosaic.version = 11 : i64} {
  func.func @rgb_norm_kernel(%arg0: i32, %arg1: i32, %arg2: memref<6x256xf32, #tpu.memory_space<vmem>>, %arg3: memref<6x2xf32, #tpu.memory_space<vmem>>, %arg4: memref<6x256xf32, #tpu.memory_space<vmem>>) attributes {dimension_semantics = [#tpu.dimension_semantics<parallel>, #tpu.dimension_semantics<parallel>], iteration_bounds = array<i64: 1, 1>, scalar_prefetch = 0 : i64, scratch_operands = 0 : i64, tpu.core_type = #tpu.core_type<tc>, window_params = [{transform_indices = @transform_0, window_bounds = array<i64: 6, 256>}, {transform_indices = @transform_1, window_bounds = array<i64: 6, 2>}, {transform_indices = @transform_2, window_bounds = array<i64: 6, 256>}]} {
    %c0 = arith.constant 0 : index
    %c0_0 = arith.constant 0 : index
    %0 = vector.load %arg2[%c0, %c0_0] : memref<6x256xf32, #tpu.memory_space<vmem>>, vector<6x256xf32>
    %c0_1 = arith.constant 0 : index
    %c0_2 = arith.constant 0 : index
    %1 = vector.load %arg3[%c0_1, %c0_2] : memref<6x2xf32, #tpu.memory_space<vmem>>, vector<6x2xf32>
    %2 = vector.extract_strided_slice %1 {offsets = [0, 0], sizes = [6, 1], strides = [1, 1]} : vector<6x2xf32> to vector<6x1xf32>
    %3 = vector.extract_strided_slice %1 {offsets = [0, 1], sizes = [6, 1], strides = [1, 1]} : vector<6x2xf32> to vector<6x1xf32>
    %4 = vector.broadcast %2 : vector<6x1xf32> to vector<6x256xf32>
    %5 = arith.mulf %0, %4 : vector<6x256xf32>
    %6 = vector.broadcast %3 : vector<6x1xf32> to vector<6x256xf32>
    %7 = arith.addf %5, %6 : vector<6x256xf32>
    %c0_3 = arith.constant 0 : index
    %c0_4 = arith.constant 0 : index
    %8 = vector.load %arg4[%c0_3, %c0_4] : memref<6x256xf32, #tpu.memory_space<vmem>>, vector<6x256xf32>
    tpu.vector_store %arg4[%c0_3, %c0_4], %7 {strides = array<i32>} : memref<6x256xf32, #tpu.memory_space<vmem>>, vector<6x256xf32>,
    return
  }
  func.func @transform_0(%arg0: i32, %arg1: i32) -> (i32, i32) {
    %c0_i32 = arith.constant 0 : i32
    return %arg0, %arg1 : i32, i32
  }
  func.func @transform_1(%arg0: i32, %arg1: i32) -> (i32, i32) {
    %c0_i32 = arith.constant 0 : i32
    %c0_i32_0 = arith.constant 0 : i32
    return %arg0, %c0_i32 : i32, i32
  }
  func.func @transform_2(%arg0: i32, %arg1: i32) -> (i32, i32) {
    %c0_i32 = arith.constant 0 : i32
    return %arg0, %arg1 : i32, i32
  }
}

</mosaic_0001>

<llo_original>
// kernel: tpu_custom_call.1
$region0: #{tpu_custom_call.1}
  #allocation0 [shape = 'u32[]', space=smem, size = 0x4, offset = 0x4, fixed_abs, tag = 'smem constant byte address 0x4 - core index']
  #allocation1 [shape = 'u32[144,128]{1,0:T(1,128)}', space=vmem, size = 0x12000, scoped, tag = 'internal scratch']
  %s0 = inlined_call_operand.hbm [shape: f32[6,256], index: 0, kind: input, shape index: {}]
  %s1 = inlined_call_operand.vmem [shape: f32[6,2], index: 1, kind: input, shape index: {}]
  %s2 = inlined_call_operand.hbm [shape: f32[6,256], index: 2, kind: output, shape index: {}]
  %s3 = sld [smem:[#allocation0]]
  $region22: #{tpu_custom_call.1} parent=0
    _
  %s5 = ssub.s32 1, %s3
  %s6 = scalar_select 0, %s5, %s3
  $region1: #{tpu_custom_call.1} parent=0
    #allocation2 [shape = 'u8[8192]{0}', space=vmem, size = 0x2000, scoped, tag = 'input window, operand 0, single buffered']
    #allocation3 [shape = 's32[1]{0}', space=sflag, size = 0x4, scoped, tag = 'scoped memory for tpu_custom_call.1']
    #allocation4 [shape = 's32[1]{0}', space=sflag, size = 0x4, scoped, tag = 'scoped memory for tpu_custom_call.1']
    #allocation5 [shape = 'u8[8192]{0}', space=vmem, size = 0x2000, scoped, tag = 'output window, operand 0, single buffered']
    %7 = vsyncpa [#allocation3], 0
    %8 = vsyncpa [#allocation4], 0
    // Predicated region
    $region2: #{tpu_custom_call.1} parent=1 // pred_check
      _
    $region3: #{tpu_custom_call.1} parent=1 // pred_check_branch
      %10 = sbr.rel (0) target = $region5
    $region4: #{tpu_custom_call.1} parent=1 // pred_region
      %s12 = ssub.s32 256, 256
      %13 = vsyncadd [#allocation3], %s12
      %s15 = sshll.u32 [#allocation2], 4
      %s16 = int_to_ptr.vmem [resolvable:$true] %s15
      %18 = dma.hbm_to_vmem [thread:$0]  %s0, 256, %s16, [#allocation3]
    $region5: #{tpu_custom_call.1} parent=1 // pred_fallthru
      _
    // Predicated region
    $region6: #{tpu_custom_call.1} parent=1 // pred_check
      _
    $region7: #{tpu_custom_call.1} parent=1 // pred_check_branch
      %20 = sbr.rel (0) target = $region9
    $region8: #{tpu_custom_call.1} parent=1 // pred_region
      _
    $region9: #{tpu_custom_call.1} parent=1 // pred_fallthru
      _
    // Predicated region
    $region10: #{tpu_custom_call.1} parent=1 // pred_check
      _
    $region11: #{tpu_custom_call.1} parent=1 // pred_check_branch
      %22 = sbr.rel (0) target = $region13
    $region12: #{tpu_custom_call.1} parent=1 // pred_region
      %23 = dma.done [#allocation3], 256
    $region13: #{tpu_custom_call.1} parent=1 // pred_fallthru
      _
    %v24 = vld [vmem:[#allocation2] sm:$0x3f]
    %v25 = vld [vmem:[#allocation2 + $0x8] sm:$0x3f]
    %v26 = vld [vmem:[%s1] sm:$0x3f]
    %28 = vset.pattern.permute.xlu0 0
    %29 = vperm.xlu0 %28, %v26
    %v30 = vpop.permute.xlu0 %29
    %v32 = vmul.f32 %v24, %v30
    %v33 = vmul.f32 %v25, %v30
    %34 = vset.pattern.permute.xlu0 1
    %35 = vperm.xlu0 %34, %v26
    %v36 = vpop.permute.xlu0 %35
    %v38 = vadd.f32 %v32, %v36
    %v39 = vadd.f32 %v33, %v36
    %40 = vst [vmem:[#allocation5] sm:$0x3f] %v38
    %41 = vst [vmem:[#allocation5 + $0x8] sm:$0x3f] %v39
    // Predicated region
    $region14: #{tpu_custom_call.1} parent=1 // pred_check
      _
    $region15: #{tpu_custom_call.1} parent=1 // pred_check_branch
      %43 = sbr.rel (0) target = $region17
    $region16: #{tpu_custom_call.1} parent=1 // pred_region
      %s45 = ssub.s32 256, 256
      %46 = vsyncadd [#allocation4], %s45
      %s48 = sshll.u32 [#allocation5], 4
      %s49 = int_to_ptr.vmem [resolvable:$true] %s48
      %51 = dma.vmem_to_hbm [thread:$0]  %s49, 256, %s2, [#allocation4]
    $region17: #{tpu_custom_call.1} parent=1 // pred_fallthru
      _
    // Predicated region
    $region18: #{tpu_custom_call.1} parent=1 // pred_check
      _
    $region19: #{tpu_custom_call.1} parent=1 // pred_check_branch
      %53 = sbr.rel (0) target = $region21
    $region20: #{tpu_custom_call.1} parent=1 // pred_region
      %54 = dma.done [#allocation4], 256
    $region21: #{tpu_custom_call.1} parent=1 // pred_fallthru
      _
    %55 = vsyncpa [#allocation3], 1
    %56 = vsyncpa [#allocation4], 1

</llo_original>
